<compile_context>
chip_gen: v7x
topology: tpu7x:2x2x1
jax: 0.10.0
libtpu: 0.0.40
codegen_flags: <defaults>
</compile_context>

<pallas_src>
import functools

import jax
import jax.numpy as jnp
from jax.experimental import pallas as pl
from jax.experimental.pallas import tpu as pltpu


def _classifier_heads_kernel(x3_ref, w_ref, b_ref, src_ref, tgt_ref, dom_ref):
    """x3_ref: (B, 3, E) compute dtype; w_ref: (3, E, Cp) compute dtype;
    b_ref: (3, 1, Cp) f32; src/tgt/dom refs: (B, Cp) output dtype."""
    out_refs = (src_ref, tgt_ref, dom_ref)
    for h in range(3):  # static unroll: three independent MXU GEMMs
        x_h = x3_ref[:, h, :]                              # (B, E)
        acc = jnp.dot(x_h, w_ref[h],                       # (B, Cp), f32 acc
                      preferred_element_type=jnp.float32)
        out_refs[h][...] = (acc + b_ref[h]).astype(out_refs[h].dtype)


@functools.partial(jax.jit, static_argnames=("compute_dtype",))
def classifier_forward(x, w_stack, b_stack, *, compute_dtype=jnp.bfloat16):
    """x: (B, T, E) with T >= 3; w_stack: (3, E, C); b_stack: (3, C).

    Weights are stored as (E, C) per head (transpose of PyTorch's nn.Linear
    (C, E)) so the kernel computes x @ W + b directly.
    Returns (src_logits, tgt_logits, domin_logits), each (B, C) in x.dtype.
    """
    B, T, E = x.shape
    assert T >= 3, "Classifier.forward reads tokens 0, 1, 2"
    n_heads, E_w, C = w_stack.shape
    assert n_heads == 3 and E_w == E

    # Lane-dense output: pad class dim to a multiple of 128 (e.g. 1000 -> 1024).
    Cp = ((C + 127) // 128) * 128
    if Cp != C:
        w_stack = jnp.pad(w_stack, ((0, 0), (0, 0), (0, Cp - C)))
        b_stack = jnp.pad(b_stack, ((0, 0), (0, Cp - C)))

    # Minimal contiguous token slice fused with the bf16 cast (no 3-way stack).
    x3 = x[:, :3, :].astype(compute_dtype)                 # (B, 3, E)
    w = w_stack.astype(compute_dtype)                      # (3, E, Cp)
    b = b_stack.astype(jnp.float32).reshape(3, 1, Cp)      # (3, 1, Cp), f32

    out_dtype = x.dtype
    vmem_spec = pl.BlockSpec(memory_space=pltpu.MemorySpace.VMEM)

    src, tgt, dom = pl.pallas_call(
        _classifier_heads_kernel,
        out_shape=[jax.ShapeDtypeStruct((B, Cp), out_dtype) for _ in range(3)],
        in_specs=[vmem_spec, vmem_spec, vmem_spec],
        out_specs=[vmem_spec, vmem_spec, vmem_spec],
    )(x3, w, b)

    if Cp != C:
        src, tgt, dom = src[:, :C], tgt[:, :C], dom[:, :C]
    return src, tgt, dom


def init_params(key, emb_size, n_classes):
    """Deterministic synthetic init of the three Linear layers.

    PyTorch nn.Linear stores weight as (n_classes, emb_size); we store the
    transpose (emb_size, n_classes) so the kernel computes x @ W + b directly.
    """
    keys = jax.random.split(key, 6)
    bound = 1.0 / jnp.sqrt(emb_size)
    ws, bs = [], []
    for i in range(3):
        w = jax.random.uniform(keys[2 * i], (emb_size, n_classes),
                               minval=-bound, maxval=bound, dtype=jnp.float32)
        b = jax.random.uniform(keys[2 * i + 1], (n_classes,),
                               minval=-bound, maxval=bound, dtype=jnp.float32)
        ws.append(w)
        bs.append(b)
    return jnp.stack(ws, axis=0), jnp.stack(bs, axis=0)


if __name__ == "__main__":
    # Small shapes consistent with the module's forward (needs >= 3 tokens).
    # C=1000 (module default n_classes) exercises the pad-to-1024 path.
    B, T, E, C = 2, 8, 32, 1000

    key = jax.random.PRNGKey(0)
    k_x, k_p = jax.random.split(key)
    x = jax.random.normal(k_x, (B, T, E), dtype=jnp.float32)
    w_stack, b_stack = init_params(k_p, E, C)

    src, tgt, dom = classifier_forward(x, w_stack, b_stack)
    jax.block_until_ready((src, tgt, dom))
    assert src.shape == (B, C) and tgt.shape == (B, C) and dom.shape == (B, C)

    # Reference with matching bf16 operand casts (f32 accumulation), plain JAX.
    xr = x[:, :3, :].astype(jnp.bfloat16).astype(jnp.float32)
    wr = w_stack.astype(jnp.bfloat16).astype(jnp.float32)
    refs = [xr[:, h] @ wr[h] + b_stack[h] for h in range(3)]
    for got, want in zip((src, tgt, dom), refs):
        err = float(jnp.max(jnp.abs(got - want)))
        assert jnp.allclose(got, want, atol=1e-3, rtol=1e-3), err

    print("KERNEL_OK")
</pallas_src>

<mosaic_0001>
module attributes {stable_mosaic.version = 11 : i64} {
  func.func @_classifier_heads_kernel(%arg0: memref<2x3x32xbf16, #tpu.memory_space<vmem>>, %arg1: memref<3x32x1024xbf16, #tpu.memory_space<vmem>>, %arg2: memref<3x1x1024xf32, #tpu.memory_space<vmem>>, %arg3: memref<2x1024xf32, #tpu.memory_space<vmem>>, %arg4: memref<2x1024xf32, #tpu.memory_space<vmem>>, %arg5: memref<2x1024xf32, #tpu.memory_space<vmem>>) attributes {dimension_semantics = [], scalar_prefetch = 0 : i64, scratch_operands = 0 : i64, tpu.core_type = #tpu.core_type<tc>} {
    %c0 = arith.constant 0 : index
    %c0_0 = arith.constant 0 : index
    %c0_1 = arith.constant 0 : index
    %0 = vector.load %arg0[%c0, %c0_0, %c0_1] : memref<2x3x32xbf16, #tpu.memory_space<vmem>>, vector<2x1x32xbf16>
    %1 = vector.shape_cast %0 : vector<2x1x32xbf16> to vector<2x32xbf16>
    %c0_2 = arith.constant 0 : index
    %c0_3 = arith.constant 0 : index
    %c0_4 = arith.constant 0 : index
    %2 = vector.load %arg1[%c0_2, %c0_3, %c0_4] : memref<3x32x1024xbf16, #tpu.memory_space<vmem>>, vector<1x32x1024xbf16>
    %3 = vector.shape_cast %2 : vector<1x32x1024xbf16> to vector<32x1024xbf16>
    %cst = arith.constant dense<0.000000e+00> : vector<2x1024xf32>
    %4 = tpu.matmul %1, %3, %cst {dimension_numbers = #tpu.dot_dimension_numbers<[1], [0], [0], [1], [0, 0, 1, 1], [], []>} : vector<2x32xbf16>, vector<32x1024xbf16>, vector<2x1024xf32> -> vector<2x1024xf32>
    %c0_5 = arith.constant 0 : index
    %c0_6 = arith.constant 0 : index
    %c0_7 = arith.constant 0 : index
    %5 = vector.load %arg2[%c0_5, %c0_6, %c0_7] : memref<3x1x1024xf32, #tpu.memory_space<vmem>>, vector<1x1x1024xf32>
    %6 = vector.shape_cast %5 : vector<1x1x1024xf32> to vector<1x1024xf32>
    %7 = vector.broadcast %6 : vector<1x1024xf32> to vector<2x1024xf32>
    %8 = arith.addf %4, %7 : vector<2x1024xf32>
    %c0_8 = arith.constant 0 : index
    %c0_9 = arith.constant 0 : index
    %9 = vector.load %arg3[%c0_8, %c0_9] : memref<2x1024xf32, #tpu.memory_space<vmem>>, vector<2x1024xf32>
    tpu.vector_store %arg3[%c0_8, %c0_9], %8 {strides = array<i32>} : memref<2x1024xf32, #tpu.memory_space<vmem>>, vector<2x1024xf32>,
    %c0_10 = arith.constant 0 : index
    %c1 = arith.constant 1 : index
    %c0_11 = arith.constant 0 : index
    %10 = vector.load %arg0[%c0_10, %c1, %c0_11] : memref<2x3x32xbf16, #tpu.memory_space<vmem>>, vector<2x1x32xbf16>
    %11 = vector.shape_cast %10 : vector<2x1x32xbf16> to vector<2x32xbf16>
    %c1_12 = arith.constant 1 : index
    %c0_13 = arith.constant 0 : index
    %c0_14 = arith.constant 0 : index
    %12 = vector.load %arg1[%c1_12, %c0_13, %c0_14] : memref<3x32x1024xbf16, #tpu.memory_space<vmem>>, vector<1x32x1024xbf16>
    %13 = vector.shape_cast %12 : vector<1x32x1024xbf16> to vector<32x1024xbf16>
    %cst_15 = arith.constant dense<0.000000e+00> : vector<2x1024xf32>
    %14 = tpu.matmul %11, %13, %cst_15 {dimension_numbers = #tpu.dot_dimension_numbers<[1], [0], [0], [1], [0, 0, 1, 1], [], []>} : vector<2x32xbf16>, vector<32x1024xbf16>, vector<2x1024xf32> -> vector<2x1024xf32>
    %c1_16 = arith.constant 1 : index
    %c0_17 = arith.constant 0 : index
    %c0_18 = arith.constant 0 : index
    %15 = vector.load %arg2[%c1_16, %c0_17, %c0_18] : memref<3x1x1024xf32, #tpu.memory_space<vmem>>, vector<1x1x1024xf32>
    %16 = vector.shape_cast %15 : vector<1x1x1024xf32> to vector<1x1024xf32>
    %17 = vector.broadcast %16 : vector<1x1024xf32> to vector<2x1024xf32>
    %18 = arith.addf %14, %17 : vector<2x1024xf32>
    %c0_19 = arith.constant 0 : index
    %c0_20 = arith.constant 0 : index
    %19 = vector.load %arg4[%c0_19, %c0_20] : memref<2x1024xf32, #tpu.memory_space<vmem>>, vector<2x1024xf32>
    tpu.vector_store %arg4[%c0_19, %c0_20], %18 {strides = array<i32>} : memref<2x1024xf32, #tpu.memory_space<vmem>>, vector<2x1024xf32>,
    %c0_21 = arith.constant 0 : index
    %c2 = arith.constant 2 : index
    %c0_22 = arith.constant 0 : index
    %20 = vector.load %arg0[%c0_21, %c2, %c0_22] : memref<2x3x32xbf16, #tpu.memory_space<vmem>>, vector<2x1x32xbf16>
    %21 = vector.shape_cast %20 : vector<2x1x32xbf16> to vector<2x32xbf16>
    %c2_23 = arith.constant 2 : index
    %c0_24 = arith.constant 0 : index
    %c0_25 = arith.constant 0 : index
    %22 = vector.load %arg1[%c2_23, %c0_24, %c0_25] : memref<3x32x1024xbf16, #tpu.memory_space<vmem>>, vector<1x32x1024xbf16>
    %23 = vector.shape_cast %22 : vector<1x32x1024xbf16> to vector<32x1024xbf16>
    %cst_26 = arith.constant dense<0.000000e+00> : vector<2x1024xf32>
    %24 = tpu.matmul %21, %23, %cst_26 {dimension_numbers = #tpu.dot_dimension_numbers<[1], [0], [0], [1], [0, 0, 1, 1], [], []>} : vector<2x32xbf16>, vector<32x1024xbf16>, vector<2x1024xf32> -> vector<2x1024xf32>
    %c2_27 = arith.constant 2 : index
    %c0_28 = arith.constant 0 : index
    %c0_29 = arith.constant 0 : index
    %25 = vector.load %arg2[%c2_27, %c0_28, %c0_29] : memref<3x1x1024xf32, #tpu.memory_space<vmem>>, vector<1x1x1024xf32>
    %26 = vector.shape_cast %25 : vector<1x1x1024xf32> to vector<1x1024xf32>
    %27 = vector.broadcast %26 : vector<1x1024xf32> to vector<2x1024xf32>
    %28 = arith.addf %24, %27 : vector<2x1024xf32>
    %c0_30 = arith.constant 0 : index
    %c0_31 = arith.constant 0 : index
    %29 = vector.load %arg5[%c0_30, %c0_31] : memref<2x1024xf32, #tpu.memory_space<vmem>>, vector<2x1024xf32>
    tpu.vector_store %arg5[%c0_30, %c0_31], %28 {strides = array<i32>} : memref<2x1024xf32, #tpu.memory_space<vmem>>, vector<2x1024xf32>,
    return
  }
}

</mosaic_0001>

<llo_original>
// kernel: classifier_forward.1
$region0: #{classifier_forward.1}
  #allocation0 [shape = 'u32[]', space=smem, size = 0x4, offset = 0x4, fixed_abs, tag = 'smem constant byte address 0x4 - core index']
  #allocation1 [shape = 'u32[144,128]{1,0:T(1,128)}', space=vmem, size = 0x12000, scoped, tag = 'internal scratch']
  %s0 = inlined_call_operand.vmem [shape: bf16[2,3,32], index: 0, kind: input, shape index: {}]
  %s1 = inlined_call_operand.vmem [shape: bf16[3,32,1024], index: 1, kind: input, shape index: {}]
  %s2 = inlined_call_operand.vmem [shape: f32[3,1,1024], index: 2, kind: input, shape index: {}]
  %s3 = inlined_call_operand.hbm [shape: f32[2,1024], index: 3, kind: output, shape index: {0}]
  %s4 = inlined_call_operand.hbm [shape: f32[2,1024], index: 4, kind: output, shape index: {1}]
  %s5 = inlined_call_operand.hbm [shape: f32[2,1024], index: 5, kind: output, shape index: {2}]
  %6 = xla_tuple %s3, %s4, %s5
  %s7 = sld [smem:[#allocation0]]
  $region38: #{classifier_forward.1} parent=0
    _
  %s9 = ssub.s32 1, %s7
  %s10 = scalar_select 0, %s9, %s7
  $region1: #{classifier_forward.1} parent=0
    #allocation2 [shape = 'u8[8192]{0}', space=vmem, size = 0x2000, scoped, tag = 'output window, operand 0, single buffered']
    #allocation3 [shape = 's32[1]{0}', space=sflag, size = 0x4, scoped, tag = 'scoped memory for classifier_forward.1']
    #allocation4 [shape = 'u8[8192]{0}', space=vmem, size = 0x2000, scoped, tag = 'output window, operand 1, single buffered']
    #allocation5 [shape = 's32[1]{0}', space=sflag, size = 0x4, scoped, tag = 'scoped memory for classifier_forward.1']
    #allocation6 [shape = 'u8[8192]{0}', space=vmem, size = 0x2000, scoped, tag = 'output window, operand 2, single buffered']
    %11 = vsyncpa [#allocation3], 0
    %12 = vsyncpa [#allocation5], 0
    // Predicated region
    $region2: #{classifier_forward.1} parent=1 // pred_check
      _
    $region3: #{classifier_forward.1} parent=1 // pred_check_branch
      %14 = sbr.rel (0) target = $region5
    $region4: #{classifier_forward.1} parent=1 // pred_region
      _
    $region5: #{classifier_forward.1} parent=1 // pred_fallthru
      _
    // Predicated region
    $region6: #{classifier_forward.1} parent=1 // pred_check
      _
    $region7: #{classifier_forward.1} parent=1 // pred_check_branch
      %16 = sbr.rel (0) target = $region9
    $region8: #{classifier_forward.1} parent=1 // pred_region
      _
    $region9: #{classifier_forward.1} parent=1 // pred_fallthru
      _
    // Predicated region
    $region10: #{classifier_forward.1} parent=1 // pred_check
      _
    $region11: #{classifier_forward.1} parent=1 // pred_check_branch
      %18 = sbr.rel (0) target = $region13
    $region12: #{classifier_forward.1} parent=1 // pred_region
      _
    $region13: #{classifier_forward.1} parent=1 // pred_fallthru
      _
    %v20 = vld [vmem:[%s0] sm:$0x1]
    %v21 = vld [vmem:[%s0 + $0x2] sm:$0x1]
    %v22 = vld [vmem:[%s1] sm:$0xff]
    %v23 = vld [vmem:[%s1 + $0x8] sm:$0xff]
    %v24 = vld [vmem:[%s1 + $0x10] sm:$0xff]
    %v25 = vld [vmem:[%s1 + $0x18] sm:$0xff]
    %v26 = vld [vmem:[%s1 + $0x20] sm:$0xff]
    %v27 = vld [vmem:[%s1 + $0x28] sm:$0xff]
    %v28 = vld [vmem:[%s1 + $0x30] sm:$0xff]
    %v29 = vld [vmem:[%s1 + $0x38] sm:$0xff]
    %v30 = vld [vmem:[%s1 + $0x40] sm:$0xff]
    %v31 = vld [vmem:[%s1 + $0x48] sm:$0xff]
    %v32 = vld [vmem:[%s1 + $0x50] sm:$0xff]
    %v33 = vld [vmem:[%s1 + $0x58] sm:$0xff]
    %v34 = vld [vmem:[%s1 + $0x60] sm:$0xff]
    %v35 = vld [vmem:[%s1 + $0x68] sm:$0xff]
    %v36 = vld [vmem:[%s1 + $0x70] sm:$0xff]
    %v37 = vld [vmem:[%s1 + $0x78] sm:$0xff]
    %v38 = vld [vmem:[%s2] sm:$0xff]
    %v40 = vlaneseq
    %v41 = vshrl.u32 %v40, 7
    %v42 = vsub.s32 0, %v41
    %v43 = vrot.slane %v38, %v42
    %v44 = vlaneseq
    %v45 = vshrl.u32 %v44, 7
    %v46 = vsub.s32 1, %v45
    %v47 = vrot.slane %v38, %v46
    %v48 = vlaneseq
    %v49 = vshrl.u32 %v48, 7
    %v50 = vsub.s32 2, %v49
    %v51 = vrot.slane %v38, %v50
    %v52 = vlaneseq
    %v53 = vshrl.u32 %v52, 7
    %v54 = vsub.s32 3, %v53
    %v55 = vrot.slane %v38, %v54
    %v56 = vlaneseq
    %v57 = vshrl.u32 %v56, 7
    %v58 = vsub.s32 4, %v57
    %v59 = vrot.slane %v38, %v58
    %v60 = vlaneseq
    %v61 = vshrl.u32 %v60, 7
    %v62 = vsub.s32 5, %v61
    %v63 = vrot.slane %v38, %v62
    %v64 = vlaneseq
    %v65 = vshrl.u32 %v64, 7
    %v66 = vsub.s32 6, %v65
    %v67 = vrot.slane %v38, %v66
    %v68 = vlaneseq
    %v69 = vshrl.u32 %v68, 7
    %v70 = vsub.s32 7, %v69
    %v71 = vrot.slane %v38, %v70
    %v83 = vunpack.c.l.s4 1983009808
    %v84 = vunpack.c.0.s8 %v83
    %v85 = vlaneseq
    %v86 = vshrl.u32 %v85, 7
    %v87 = vsub.s32 %v84, %v86
    %v88 = vrot.slane %v20, %v87
    %v90 = vunpack.c.l.s4 1983009808
    %v91 = vunpack.c.0.s8 %v90
    %v92 = vlaneseq
    %v93 = vshrl.u32 %v92, 7
    %v94 = vsub.s32 %v91, %v93
    %v95 = vrot.slane %v21, %v94
    %v96 = vunpack.c.l.b16 %v88
    %v97 = vunpack.c.l.b16 %v95
    %v98 = vrot.slane %v97, 7
    %vm99 = vcmask 1041409
    %v100 = vsel %vm99, %v98, %v96
    %v101 = vpack.c.b16 %v100, %v100
    %v118 = vunpack.c.l.b16 %v22
    %v119 = vunpack.c.h.b16 %v22
    %v120 = vunpack.c.l.b16 %v23
    %v121 = vunpack.c.h.b16 %v23
    %v122 = vunpack.c.l.b16 %v24
    %v123 = vunpack.c.h.b16 %v24
    %v124 = vunpack.c.l.b16 %v25
    %v125 = vunpack.c.h.b16 %v25
    %v126 = vunpack.c.l.b16 %v26
    %v127 = vunpack.c.h.b16 %v26
    %v128 = vunpack.c.l.b16 %v27
    %v129 = vunpack.c.h.b16 %v27
    %v130 = vunpack.c.l.b16 %v28
    %v131 = vunpack.c.h.b16 %v28
    %v132 = vunpack.c.l.b16 %v29
    %v133 = vunpack.c.h.b16 %v29
    %v134 = vunpack.c.l.b16 %v30
    %v135 = vunpack.c.h.b16 %v30
    %v136 = vunpack.c.l.b16 %v31
    %v137 = vunpack.c.h.b16 %v31
    %v138 = vunpack.c.l.b16 %v32
    %v139 = vunpack.c.h.b16 %v32
    %v140 = vunpack.c.l.b16 %v33
    %v141 = vunpack.c.h.b16 %v33
    %v142 = vunpack.c.l.b16 %v34
    %v143 = vunpack.c.h.b16 %v34
    %v144 = vunpack.c.l.b16 %v35
    %v145 = vunpack.c.h.b16 %v35
    %v146 = vunpack.c.l.b16 %v36
    %v147 = vunpack.c.h.b16 %v36
    %v148 = vunpack.c.l.b16 %v37
    %v149 = vunpack.c.h.b16 %v37
    %v150 = vpack.c.b16 %v126, %v118
    %v151 = vpack.c.b16 %v127, %v119
    %v152 = vpack.c.b16 %v128, %v120
    %v153 = vpack.c.b16 %v129, %v121
    %v154 = vpack.c.b16 %v130, %v122
    %v155 = vpack.c.b16 %v131, %v123
    %v156 = vpack.c.b16 %v132, %v124
    %v157 = vpack.c.b16 %v133, %v125
    %v158 = vpack.c.b16 %v142, %v134
    %v159 = vpack.c.b16 %v143, %v135
    %v160 = vpack.c.b16 %v144, %v136
    %v161 = vpack.c.b16 %v145, %v137
    %v162 = vpack.c.b16 %v146, %v138
    %v163 = vpack.c.b16 %v147, %v139
    %v164 = vpack.c.b16 %v148, %v140
    %v165 = vpack.c.b16 %v149, %v141
    %vm182 = vcmask 261120
    %v184 = vsel %vm182, %v101, 0
    %186 = vmatprep.subr.bf16.mxu0 %v151
    %187 = vmatpush1.bf16.msra.mxu0 %v150
    %188 = vmatprep.subr.bf16.mxu0 %v159
    %189 = vmatpush1.bf16.msra.mxu0 %v158
    %190 = vmatprep.subr.bf16.mxu0 0
    %191 = vmatpush1.bf16.msra.mxu0 0
    %192 = vmatprep.subr.bf16.mxu0 0
    %193 = vmatpush1.bf16.msra.mxu0 0
    %194 = vmatprep.subr.bf16.mxu0 0
    %195 = vmatpush1.bf16.msra.mxu0 0
    %196 = vmatprep.subr.bf16.mxu0 0
    %197 = vmatpush1.bf16.msra.mxu0 0
    %198 = vmatprep.subr.bf16.mxu0 0
    %199 = vmatpush1.bf16.msra.mxu0 0
    %200 = vmatprep.subr.bf16.mxu0 0
    %201 = vmatpush1.bf16.msra.mxu0 0
    %202 = vmatprep.subr.bf16.mxu0 0
    %203 = vmatpush1.bf16.msra.mxu0 0
    %204 = vmatprep.subr.bf16.mxu0 0
    %205 = vmatpush1.bf16.msra.mxu0 0
    %206 = vmatprep.subr.bf16.mxu0 0
    %207 = vmatpush1.bf16.msra.mxu0 0
    %208 = vmatprep.subr.bf16.mxu0 0
    %209 = vmatpush1.bf16.msra.mxu0 0
    %210 = vmatprep.subr.bf16.mxu0 0
    %211 = vmatpush1.bf16.msra.mxu0 0
    %212 = vmatprep.subr.bf16.mxu0 0
    %213 = vmatpush1.bf16.msra.mxu0 0
    %214 = vmatprep.subr.bf16.mxu0 0
    %215 = vmatpush1.bf16.msra.mxu0 0
    %216 = vmatprep.subr.bf16.mxu0 0
    %217 = vmatpush1.bf16.msra.mxu0 0
    %218 = vmatprep.mubr.bf16.mxu0 0
    %219 = vmatmul.mubr.bf16.gmra.mrb[0].mxu0 %v184
    %v220 = vpop.f32.mrb[0].mxu0
    %v221 = vadd.f32 %v43, %v220
    %v222 = vpop.f32.mrb[0].mxu0
    %v223 = vadd.f32 %v47, %v222
    %v224 = vpop.f32.mrb[0].mxu0
    %v225 = vpop.f32.mrb[0].mxu0
    %226 = vdwg.mxu0
    %227 = vmatprep.subr.bf16.mxu0 %v153
    %228 = vmatpush1.bf16.msra.mxu0 %v152
    %229 = vmatprep.subr.bf16.mxu0 %v161
    %230 = vmatpush1.bf16.msra.mxu0 %v160
    %231 = vmatprep.subr.bf16.mxu0 0
    %232 = vmatpush1.bf16.msra.mxu0 0
    %233 = vmatprep.subr.bf16.mxu0 0
    %234 = vmatpush1.bf16.msra.mxu0 0
    %235 = vmatprep.subr.bf16.mxu0 0
    %236 = vmatpush1.bf16.msra.mxu0 0
    %237 = vmatprep.subr.bf16.mxu0 0
    %238 = vmatpush1.bf16.msra.mxu0 0
    %239 = vmatprep.subr.bf16.mxu0 0
    %240 = vmatpush1.bf16.msra.mxu0 0
    %241 = vmatprep.subr.bf16.mxu0 0
    %242 = vmatpush1.bf16.msra.mxu0 0
    %243 = vmatprep.subr.bf16.mxu0 0
    %244 = vmatpush1.bf16.msra.mxu0 0
    %245 = vmatprep.subr.bf16.mxu0 0
    %246 = vmatpush1.bf16.msra.mxu0 0
    %247 = vmatprep.subr.bf16.mxu0 0
    %248 = vmatpush1.bf16.msra.mxu0 0
    %249 = vmatprep.subr.bf16.mxu0 0
    %250 = vmatpush1.bf16.msra.mxu0 0
    %251 = vmatprep.subr.bf16.mxu0 0
    %252 = vmatpush1.bf16.msra.mxu0 0
    %253 = vmatprep.subr.bf16.mxu0 0
    %254 = vmatpush1.bf16.msra.mxu0 0
    %255 = vmatprep.subr.bf16.mxu0 0
    %256 = vmatpush1.bf16.msra.mxu0 0
    %257 = vmatprep.subr.bf16.mxu0 0
    %258 = vmatpush1.bf16.msra.mxu0 0
    %259 = vmatprep.mubr.bf16.mxu0 0
    %260 = vmatmul.mubr.bf16.gmra.mrb[0].mxu0 %v184
    %v261 = vpop.f32.mrb[0].mxu0
    %v262 = vadd.f32 %v51, %v261
    %v263 = vpop.f32.mrb[0].mxu0
    %v264 = vadd.f32 %v55, %v263
    %v265 = vpop.f32.mrb[0].mxu0
    %v266 = vpop.f32.mrb[0].mxu0
    %267 = vdwg.mxu0
    %268 = vmatprep.subr.bf16.mxu0 %v155
    %269 = vmatpush1.bf16.msra.mxu0 %v154
    %270 = vmatprep.subr.bf16.mxu0 %v163
    %271 = vmatpush1.bf16.msra.mxu0 %v162
    %272 = vmatprep.subr.bf16.mxu0 0
    %273 = vmatpush1.bf16.msra.mxu0 0
    %274 = vmatprep.subr.bf16.mxu0 0
    %275 = vmatpush1.bf16.msra.mxu0 0
    %276 = vmatprep.subr.bf16.mxu0 0
    %277 = vmatpush1.bf16.msra.mxu0 0
    %278 = vmatprep.subr.bf16.mxu0 0
    %279 = vmatpush1.bf16.msra.mxu0 0
    %280 = vmatprep.subr.bf16.mxu0 0
    %281 = vmatpush1.bf16.msra.mxu0 0
    %282 = vmatprep.subr.bf16.mxu0 0
    %283 = vmatpush1.bf16.msra.mxu0 0
    %284 = vmatprep.subr.bf16.mxu0 0
    %285 = vmatpush1.bf16.msra.mxu0 0
    %286 = vmatprep.subr.bf16.mxu0 0
    %287 = vmatpush1.bf16.msra.mxu0 0
    %288 = vmatprep.subr.bf16.mxu0 0
    %289 = vmatpush1.bf16.msra.mxu0 0
    %290 = vmatprep.subr.bf16.mxu0 0
    %291 = vmatpush1.bf16.msra.mxu0 0
    %292 = vmatprep.subr.bf16.mxu0 0
    %293 = vmatpush1.bf16.msra.mxu0 0
    %294 = vmatprep.subr.bf16.mxu0 0
    %295 = vmatpush1.bf16.msra.mxu0 0
    %296 = vmatprep.subr.bf16.mxu0 0
    %297 = vmatpush1.bf16.msra.mxu0 0
    %298 = vmatprep.subr.bf16.mxu0 0
    %299 = vmatpush1.bf16.msra.mxu0 0
    %300 = vmatprep.mubr.bf16.mxu0 0
    %301 = vmatmul.mubr.bf16.gmra.mrb[0].mxu0 %v184
    %v302 = vpop.f32.mrb[0].mxu0
    %v303 = vadd.f32 %v59, %v302
    %v304 = vpop.f32.mrb[0].mxu0
    %v305 = vadd.f32 %v63, %v304
    %v306 = vpop.f32.mrb[0].mxu0
    %v307 = vpop.f32.mrb[0].mxu0
    %308 = vdwg.mxu0
    %309 = vmatprep.subr.bf16.mxu0 %v157
    %310 = vmatpush1.bf16.msra.mxu0 %v156
    %311 = vmatprep.subr.bf16.mxu0 %v165
    %312 = vmatpush1.bf16.msra.mxu0 %v164
    %313 = vmatprep.subr.bf16.mxu0 0
    %314 = vmatpush1.bf16.msra.mxu0 0
    %315 = vmatprep.subr.bf16.mxu0 0
    %316 = vmatpush1.bf16.msra.mxu0 0
    %317 = vmatprep.subr.bf16.mxu0 0
    %318 = vmatpush1.bf16.msra.mxu0 0
    %319 = vmatprep.subr.bf16.mxu0 0
    %320 = vmatpush1.bf16.msra.mxu0 0
    %321 = vmatprep.subr.bf16.mxu0 0
    %322 = vmatpush1.bf16.msra.mxu0 0
    %323 = vmatprep.subr.bf16.mxu0 0
    %324 = vmatpush1.bf16.msra.mxu0 0
    %325 = vmatprep.subr.bf16.mxu0 0
    %326 = vmatpush1.bf16.msra.mxu0 0
    %327 = vmatprep.subr.bf16.mxu0 0
    %328 = vmatpush1.bf16.msra.mxu0 0
    %329 = vmatprep.subr.bf16.mxu0 0
    %330 = vmatpush1.bf16.msra.mxu0 0
    %331 = vmatprep.subr.bf16.mxu0 0
    %332 = vmatpush1.bf16.msra.mxu0 0
    %333 = vmatprep.subr.bf16.mxu0 0
    %334 = vmatpush1.bf16.msra.mxu0 0
    %335 = vmatprep.subr.bf16.mxu0 0
    %336 = vmatpush1.bf16.msra.mxu0 0
    %337 = vmatprep.subr.bf16.mxu0 0
    %338 = vmatpush1.bf16.msra.mxu0 0
    %339 = vmatprep.subr.bf16.mxu0 0
    %340 = vmatpush1.bf16.msra.mxu0 0
    %341 = vmatprep.mubr.bf16.mxu0 0
    %342 = vmatmul.mubr.bf16.gmra.mrb[0].mxu0 %v184
    %v343 = vpop.f32.mrb[0].mxu0
    %v344 = vadd.f32 %v67, %v343
    %v345 = vpop.f32.mrb[0].mxu0
    %v346 = vadd.f32 %v71, %v345
    %v347 = vpop.f32.mrb[0].mxu0
    %v348 = vpop.f32.mrb[0].mxu0
    %349 = vdwg.mxu0
    %v358 = vcombine.low %v221, %v223
    %v359 = vcombine.low %v262, %v264
    %v361 = vunpack.c.l.s4 1983009808
    %v362 = vunpack.c.0.s8 %v361
    %v363 = vlaneseq
    %v364 = vshrl.u32 %v363, 7
    %v365 = vsub.s32 %v362, %v364
    %v366 = vrot.slane %v358, %v365
    %v368 = vunpack.c.l.s4 1983009808
    %v369 = vunpack.c.0.s8 %v368
    %v370 = vlaneseq
    %v371 = vshrl.u32 %v370, 7
    %v372 = vsub.s32 %v369, %v371
    %v373 = vrot.slane %v359, %v372
    %v374 = vcombine.low %v366, %v373
    %v375 = vcombine.low %v303, %v305
    %v376 = vcombine.low %v344, %v346
    %v378 = vunpack.c.l.s4 1983009808
    %v379 = vunpack.c.0.s8 %v378
    %v380 = vlaneseq
    %v381 = vshrl.u32 %v380, 7
    %v382 = vsub.s32 %v379, %v381
    %v383 = vrot.slane %v375, %v382
    %v385 = vunpack.c.l.s4 1983009808
    %v386 = vunpack.c.0.s8 %v385
    %v387 = vlaneseq
    %v388 = vshrl.u32 %v387, 7
    %v389 = vsub.s32 %v386, %v388
    %v390 = vrot.slane %v376, %v389
    %v391 = vcombine.low %v383, %v390
    %394 = vst [vmem:[#allocation2] sm:$0xff] %v374
    %395 = vst [vmem:[#allocation2 + $0x8] sm:$0xff] %v391
    %v396 = vld [vmem:[%s0] sm:$0x1]
    %v397 = vld [vmem:[%s0 + $0x2] sm:$0x1]
    %s398 = scalar_lea.vmem %s1, 128
    %v399 = vld [vmem:[%s398] sm:$0xff]
    %v400 = vld [vmem:[%s398 + $0x8] sm:$0xff]
    %v401 = vld [vmem:[%s398 + $0x10] sm:$0xff]
    %v402 = vld [vmem:[%s398 + $0x18] sm:$0xff]
    %v403 = vld [vmem:[%s398 + $0x20] sm:$0xff]
    %v404 = vld [vmem:[%s398 + $0x28] sm:$0xff]
    %v405 = vld [vmem:[%s398 + $0x30] sm:$0xff]
    %v406 = vld [vmem:[%s398 + $0x38] sm:$0xff]
    %v407 = vld [vmem:[%s398 + $0x40] sm:$0xff]
    %v408 = vld [vmem:[%s398 + $0x48] sm:$0xff]
    %v409 = vld [vmem:[%s398 + $0x50] sm:$0xff]
    %v410 = vld [vmem:[%s398 + $0x58] sm:$0xff]
    %v411 = vld [vmem:[%s398 + $0x60] sm:$0xff]
    %v412 = vld [vmem:[%s398 + $0x68] sm:$0xff]
    %v413 = vld [vmem:[%s398 + $0x70] sm:$0xff]
    %v414 = vld [vmem:[%s398 + $0x78] sm:$0xff]
    %s415 = scalar_lea.vmem %s2, 8
    %v416 = vld [vmem:[%s415] sm:$0xff]
    %v418 = vlaneseq
    %v419 = vshrl.u32 %v418, 7
    %v420 = vsub.s32 0, %v419
    %v421 = vrot.slane %v416, %v420
    %v422 = vlaneseq
    %v423 = vshrl.u32 %v422, 7
    %v424 = vsub.s32 1, %v423
    %v425 = vrot.slane %v416, %v424
    %v426 = vlaneseq
    %v427 = vshrl.u32 %v426, 7
    %v428 = vsub.s32 2, %v427
    %v429 = vrot.slane %v416, %v428
    %v430 = vlaneseq
    %v431 = vshrl.u32 %v430, 7
    %v432 = vsub.s32 3, %v431
    %v433 = vrot.slane %v416, %v432
    %v434 = vlaneseq
    %v435 = vshrl.u32 %v434, 7
    %v436 = vsub.s32 4, %v435
    %v437 = vrot.slane %v416, %v436
    %v438 = vlaneseq
    %v439 = vshrl.u32 %v438, 7
    %v440 = vsub.s32 5, %v439
    %v441 = vrot.slane %v416, %v440
    %v442 = vlaneseq
    %v443 = vshrl.u32 %v442, 7
    %v444 = vsub.s32 6, %v443
    %v445 = vrot.slane %v416, %v444
    %v446 = vlaneseq
    %v447 = vshrl.u32 %v446, 7
    %v448 = vsub.s32 7, %v447
    %v449 = vrot.slane %v416, %v448
    %v461 = vunpack.c.l.s4 1983009808
    %v462 = vunpack.c.0.s8 %v461
    %v463 = vlaneseq
    %v464 = vshrl.u32 %v463, 7
    %v465 = vsub.s32 %v462, %v464
    %v466 = vrot.slane %v396, %v465
    %v468 = vunpack.c.l.s4 1983009808
    %v469 = vunpack.c.0.s8 %v468
    %v470 = vlaneseq
    %v471 = vshrl.u32 %v470, 7
    %v472 = vsub.s32 %v469, %v471
    %v473 = vrot.slane %v397, %v472
    %v474 = vunpack.c.l.b16 %v466
    %v475 = vunpack.c.l.b16 %v473
    %v476 = vrot.slane %v474, 1
    %v477 = vsel %vm99, %v475, %v476
    %v478 = vpack.c.b16 %v477, %v477
    %v495 = vunpack.c.l.b16 %v399
    %v496 = vunpack.c.h.b16 %v399
    %v497 = vunpack.c.l.b16 %v400
    %v498 = vunpack.c.h.b16 %v400
    %v499 = vunpack.c.l.b16 %v401
    %v500 = vunpack.c.h.b16 %v401
    %v501 = vunpack.c.l.b16 %v402
    %v502 = vunpack.c.h.b16 %v402
    %v503 = vunpack.c.l.b16 %v403
    %v504 = vunpack.c.h.b16 %v403
    %v505 = vunpack.c.l.b16 %v404
    %v506 = vunpack.c.h.b16 %v404
    %v507 = vunpack.c.l.b16 %v405
    %v508 = vunpack.c.h.b16 %v405
    %v509 = vunpack.c.l.b16 %v406
    %v510 = vunpack.c.h.b16 %v406
    %v511 = vunpack.c.l.b16 %v407
    %v512 = vunpack.c.h.b16 %v407
    %v513 = vunpack.c.l.b16 %v408
    %v514 = vunpack.c.h.b16 %v408
    %v515 = vunpack.c.l.b16 %v409
    %v516 = vunpack.c.h.b16 %v409
    %v517 = vunpack.c.l.b16 %v410
    %v518 = vunpack.c.h.b16 %v410
    %v519 = vunpack.c.l.b16 %v411
    %v520 = vunpack.c.h.b16 %v411
    %v521 = vunpack.c.l.b16 %v412
    %v522 = vunpack.c.h.b16 %v412
    %v523 = vunpack.c.l.b16 %v413
    %v524 = vunpack.c.h.b16 %v413
    %v525 = vunpack.c.l.b16 %v414
    %v526 = vunpack.c.h.b16 %v414
    %v527 = vpack.c.b16 %v503, %v495
    %v528 = vpack.c.b16 %v504, %v496
    %v529 = vpack.c.b16 %v505, %v497
    %v530 = vpack.c.b16 %v506, %v498
    %v531 = vpack.c.b16 %v507, %v499
    %v532 = vpack.c.b16 %v508, %v500
    %v533 = vpack.c.b16 %v509, %v501
    %v534 = vpack.c.b16 %v510, %v502
    %v535 = vpack.c.b16 %v519, %v511
    %v536 = vpack.c.b16 %v520, %v512
    %v537 = vpack.c.b16 %v521, %v513
    %v538 = vpack.c.b16 %v522, %v514
    %v539 = vpack.c.b16 %v523, %v515
    %v540 = vpack.c.b16 %v524, %v516
    %v541 = vpack.c.b16 %v525, %v517
    %v542 = vpack.c.b16 %v526, %v518
    %v560 = vsel %vm182, %v478, 0
    %562 = vmatprep.subr.bf16.mxu0 %v528
    %563 = vmatpush1.bf16.msra.mxu0 %v527
    %564 = vmatprep.subr.bf16.mxu0 %v536
    %565 = vmatpush1.bf16.msra.mxu0 %v535
    %566 = vmatprep.subr.bf16.mxu0 0
    %567 = vmatpush1.bf16.msra.mxu0 0
    %568 = vmatprep.subr.bf16.mxu0 0
    %569 = vmatpush1.bf16.msra.mxu0 0
    %570 = vmatprep.subr.bf16.mxu0 0
    %571 = vmatpush1.bf16.msra.mxu0 0
    %572 = vmatprep.subr.bf16.mxu0 0
    %573 = vmatpush1.bf16.msra.mxu0 0
    %574 = vmatprep.subr.bf16.mxu0 0
    %575 = vmatpush1.bf16.msra.mxu0 0
    %576 = vmatprep.subr.bf16.mxu0 0
    %577 = vmatpush1.bf16.msra.mxu0 0
    %578 = vmatprep.subr.bf16.mxu0 0
    %579 = vmatpush1.bf16.msra.mxu0 0
    %580 = vmatprep.subr.bf16.mxu0 0
    %581 = vmatpush1.bf16.msra.mxu0 0
    %582 = vmatprep.subr.bf16.mxu0 0
    %583 = vmatpush1.bf16.msra.mxu0 0
    %584 = vmatprep.subr.bf16.mxu0 0
    %585 = vmatpush1.bf16.msra.mxu0 0
    %586 = vmatprep.subr.bf16.mxu0 0
    %587 = vmatpush1.bf16.msra.mxu0 0
    %588 = vmatprep.subr.bf16.mxu0 0
    %589 = vmatpush1.bf16.msra.mxu0 0
    %590 = vmatprep.subr.bf16.mxu0 0
    %591 = vmatpush1.bf16.msra.mxu0 0
    %592 = vmatprep.subr.bf16.mxu0 0
    %593 = vmatpush1.bf16.msra.mxu0 0
    %594 = vmatprep.mubr.bf16.mxu0 0
    %595 = vmatmul.mubr.bf16.gmra.mrb[0].mxu0 %v560
    %v596 = vpop.f32.mrb[0].mxu0
    %v597 = vadd.f32 %v421, %v596
    %v598 = vpop.f32.mrb[0].mxu0
    %v599 = vadd.f32 %v425, %v598
    %v600 = vpop.f32.mrb[0].mxu0
    %v601 = vpop.f32.mrb[0].mxu0
    %602 = vdwg.mxu0
    %603 = vmatprep.subr.bf16.mxu0 %v530
    %604 = vmatpush1.bf16.msra.mxu0 %v529
    %605 = vmatprep.subr.bf16.mxu0 %v538
    %606 = vmatpush1.bf16.msra.mxu0 %v537
    %607 = vmatprep.subr.bf16.mxu0 0
    %608 = vmatpush1.bf16.msra.mxu0 0
    %609 = vmatprep.subr.bf16.mxu0 0
    %610 = vmatpush1.bf16.msra.mxu0 0
    %611 = vmatprep.subr.bf16.mxu0 0
    %612 = vmatpush1.bf16.msra.mxu0 0
    %613 = vmatprep.subr.bf16.mxu0 0
    %614 = vmatpush1.bf16.msra.mxu0 0
    %615 = vmatprep.subr.bf16.mxu0 0
    %616 = vmatpush1.bf16.msra.mxu0 0
    %617 = vmatprep.subr.bf16.mxu0 0
    %618 = vmatpush1.bf16.msra.mxu0 0
    %619 = vmatprep.subr.bf16.mxu0 0
    %620 = vmatpush1.bf16.msra.mxu0 0
    %621 = vmatprep.subr.bf16.mxu0 0
    %622 = vmatpush1.bf16.msra.mxu0 0
    %623 = vmatprep.subr.bf16.mxu0 0
    %624 = vmatpush1.bf16.msra.mxu0 0
    %625 = vmatprep.subr.bf16.mxu0 0
    %626 = vmatpush1.bf16.msra.mxu0 0
    %627 = vmatprep.subr.bf16.mxu0 0
    %628 = vmatpush1.bf16.msra.mxu0 0
    %629 = vmatprep.subr.bf16.mxu0 0
    %630 = vmatpush1.bf16.msra.mxu0 0
    %631 = vmatprep.subr.bf16.mxu0 0
    %632 = vmatpush1.bf16.msra.mxu0 0
    %633 = vmatprep.subr.bf16.mxu0 0
    %634 = vmatpush1.bf16.msra.mxu0 0
    %635 = vmatprep.mubr.bf16.mxu0 0
    %636 = vmatmul.mubr.bf16.gmra.mrb[0].mxu0 %v560
    %v637 = vpop.f32.mrb[0].mxu0
    %v638 = vadd.f32 %v429, %v637
    %v639 = vpop.f32.mrb[0].mxu0
    %v640 = vadd.f32 %v433, %v639
    %v641 = vpop.f32.mrb[0].mxu0
    %v642 = vpop.f32.mrb[0].mxu0
    %643 = vdwg.mxu0
    %644 = vmatprep.subr.bf16.mxu0 %v532
    %645 = vmatpush1.bf16.msra.mxu0 %v531
    %646 = vmatprep.subr.bf16.mxu0 %v540
    %647 = vmatpush1.bf16.msra.mxu0 %v539
    %648 = vmatprep.subr.bf16.mxu0 0
    %649 = vmatpush1.bf16.msra.mxu0 0
    %650 = vmatprep.subr.bf16.mxu0 0
    %651 = vmatpush1.bf16.msra.mxu0 0
    %652 = vmatprep.subr.bf16.mxu0 0
    %653 = vmatpush1.bf16.msra.mxu0 0
    %654 = vmatprep.subr.bf16.mxu0 0
    %655 = vmatpush1.bf16.msra.mxu0 0
    %656 = vmatprep.subr.bf16.mxu0 0
    %657 = vmatpush1.bf16.msra.mxu0 0
    %658 = vmatprep.subr.bf16.mxu0 0
    %659 = vmatpush1.bf16.msra.mxu0 0
    %660 = vmatprep.subr.bf16.mxu0 0
    %661 = vmatpush1.bf16.msra.mxu0 0
    %662 = vmatprep.subr.bf16.mxu0 0
    %663 = vmatpush1.bf16.msra.mxu0 0
    %664 = vmatprep.subr.bf16.mxu0 0
    %665 = vmatpush1.bf16.msra.mxu0 0
    %666 = vmatprep.subr.bf16.mxu0 0
    %667 = vmatpush1.bf16.msra.mxu0 0
    %668 = vmatprep.subr.bf16.mxu0 0
    %669 = vmatpush1.bf16.msra.mxu0 0
    %670 = vmatprep.subr.bf16.mxu0 0
    %671 = vmatpush1.bf16.msra.mxu0 0
    %672 = vmatprep.subr.bf16.mxu0 0
    %673 = vmatpush1.bf16.msra.mxu0 0
    %674 = vmatprep.subr.bf16.mxu0 0
    %675 = vmatpush1.bf16.msra.mxu0 0
    %676 = vmatprep.mubr.bf16.mxu0 0
    %677 = vmatmul.mubr.bf16.gmra.mrb[0].mxu0 %v560
    %v678 = vpop.f32.mrb[0].mxu0
    %v679 = vadd.f32 %v437, %v678
    %v680 = vpop.f32.mrb[0].mxu0
    %v681 = vadd.f32 %v441, %v680
    %v682 = vpop.f32.mrb[0].mxu0
    %v683 = vpop.f32.mrb[0].mxu0
    %684 = vdwg.mxu0
    %685 = vmatprep.subr.bf16.mxu0 %v534
    %686 = vmatpush1.bf16.msra.mxu0 %v533
    %687 = vmatprep.subr.bf16.mxu0 %v542
    %688 = vmatpush1.bf16.msra.mxu0 %v541
    %689 = vmatprep.subr.bf16.mxu0 0
    %690 = vmatpush1.bf16.msra.mxu0 0
    %691 = vmatprep.subr.bf16.mxu0 0
    %692 = vmatpush1.bf16.msra.mxu0 0
    %693 = vmatprep.subr.bf16.mxu0 0
    %694 = vmatpush1.bf16.msra.mxu0 0
    %695 = vmatprep.subr.bf16.mxu0 0
    %696 = vmatpush1.bf16.msra.mxu0 0
    %697 = vmatprep.subr.bf16.mxu0 0
    %698 = vmatpush1.bf16.msra.mxu0 0
    %699 = vmatprep.subr.bf16.mxu0 0
    %700 = vmatpush1.bf16.msra.mxu0 0
    %701 = vmatprep.subr.bf16.mxu0 0
    %702 = vmatpush1.bf16.msra.mxu0 0
    %703 = vmatprep.subr.bf16.mxu0 0
    %704 = vmatpush1.bf16.msra.mxu0 0
    %705 = vmatprep.subr.bf16.mxu0 0
    %706 = vmatpush1.bf16.msra.mxu0 0
    %707 = vmatprep.subr.bf16.mxu0 0
    %708 = vmatpush1.bf16.msra.mxu0 0
    %709 = vmatprep.subr.bf16.mxu0 0
    %710 = vmatpush1.bf16.msra.mxu0 0
    %711 = vmatprep.subr.bf16.mxu0 0
    %712 = vmatpush1.bf16.msra.mxu0 0
    %713 = vmatprep.subr.bf16.mxu0 0
    %714 = vmatpush1.bf16.msra.mxu0 0
    %715 = vmatprep.subr.bf16.mxu0 0
    %716 = vmatpush1.bf16.msra.mxu0 0
    %717 = vmatprep.mubr.bf16.mxu0 0
    %718 = vmatmul.mubr.bf16.gmra.mrb[0].mxu0 %v560
    %v719 = vpop.f32.mrb[0].mxu0
    %v720 = vadd.f32 %v445, %v719
    %v721 = vpop.f32.mrb[0].mxu0
    %v722 = vadd.f32 %v449, %v721
    %v723 = vpop.f32.mrb[0].mxu0
    %v724 = vpop.f32.mrb[0].mxu0
    %725 = vdwg.mxu0
    %v734 = vcombine.low %v597, %v599
    %v735 = vcombine.low %v638, %v640
    %v737 = vunpack.c.l.s4 1983009808
    %v738 = vunpack.c.0.s8 %v737
    %v739 = vlaneseq
    %v740 = vshrl.u32 %v739, 7
    %v741 = vsub.s32 %v738, %v740
    %v742 = vrot.slane %v734, %v741
    %v744 = vunpack.c.l.s4 1983009808
    %v745 = vunpack.c.0.s8 %v744
    %v746 = vlaneseq
    %v747 = vshrl.u32 %v746, 7
    %v748 = vsub.s32 %v745, %v747
    %v749 = vrot.slane %v735, %v748
    %v750 = vcombine.low %v742, %v749
    %v751 = vcombine.low %v679, %v681
    %v752 = vcombine.low %v720, %v722
    %v754 = vunpack.c.l.s4 1983009808
    %v755 = vunpack.c.0.s8 %v754
    %v756 = vlaneseq
    %v757 = vshrl.u32 %v756, 7
    %v758 = vsub.s32 %v755, %v757
    %v759 = vrot.slane %v751, %v758
    %v761 = vunpack.c.l.s4 1983009808
    %v762 = vunpack.c.0.s8 %v761
    %v763 = vlaneseq
    %v764 = vshrl.u32 %v763, 7
    %v765 = vsub.s32 %v762, %v764
    %v766 = vrot.slane %v752, %v765
    %v767 = vcombine.low %v759, %v766
    %770 = vst [vmem:[#allocation4] sm:$0xff] %v750
    %771 = vst [vmem:[#allocation4 + $0x8] sm:$0xff] %v767
    %v772 = vld [vmem:[%s0] sm:$0x2]
    %v773 = vld [vmem:[%s0 + $0x2] sm:$0x2]
    %s774 = scalar_lea.vmem %s1, 256
    %v775 = vld [vmem:[%s774] sm:$0xff]
    %v776 = vld [vmem:[%s774 + $0x8] sm:$0xff]
    %v777 = vld [vmem:[%s774 + $0x10] sm:$0xff]
    %v778 = vld [vmem:[%s774 + $0x18] sm:$0xff]
    %v779 = vld [vmem:[%s774 + $0x20] sm:$0xff]
    %v780 = vld [vmem:[%s774 + $0x28] sm:$0xff]
    %v781 = vld [vmem:[%s774 + $0x30] sm:$0xff]
    %v782 = vld [vmem:[%s774 + $0x38] sm:$0xff]
    %v783 = vld [vmem:[%s774 + $0x40] sm:$0xff]
    %v784 = vld [vmem:[%s774 + $0x48] sm:$0xff]
    %v785 = vld [vmem:[%s774 + $0x50] sm:$0xff]
    %v786 = vld [vmem:[%s774 + $0x58] sm:$0xff]
    %v787 = vld [vmem:[%s774 + $0x60] sm:$0xff]
    %v788 = vld [vmem:[%s774 + $0x68] sm:$0xff]
    %v789 = vld [vmem:[%s774 + $0x70] sm:$0xff]
    %v790 = vld [vmem:[%s774 + $0x78] sm:$0xff]
    %s791 = scalar_lea.vmem %s2, 16
    %v792 = vld [vmem:[%s791] sm:$0xff]
    %v794 = vlaneseq
    %v795 = vshrl.u32 %v794, 7
    %v796 = vsub.s32 0, %v795
    %v797 = vrot.slane %v792, %v796
    %v798 = vlaneseq
    %v799 = vshrl.u32 %v798, 7
    %v800 = vsub.s32 1, %v799
    %v801 = vrot.slane %v792, %v800
    %v802 = vlaneseq
    %v803 = vshrl.u32 %v802, 7
    %v804 = vsub.s32 2, %v803
    %v805 = vrot.slane %v792, %v804
    %v806 = vlaneseq
    %v807 = vshrl.u32 %v806, 7
    %v808 = vsub.s32 3, %v807
    %v809 = vrot.slane %v792, %v808
    %v810 = vlaneseq
    %v811 = vshrl.u32 %v810, 7
    %v812 = vsub.s32 4, %v811
    %v813 = vrot.slane %v792, %v812
    %v814 = vlaneseq
    %v815 = vshrl.u32 %v814, 7
    %v816 = vsub.s32 5, %v815
    %v817 = vrot.slane %v792, %v816
    %v818 = vlaneseq
    %v819 = vshrl.u32 %v818, 7
    %v820 = vsub.s32 6, %v819
    %v821 = vrot.slane %v792, %v820
    %v822 = vlaneseq
    %v823 = vshrl.u32 %v822, 7
    %v824 = vsub.s32 7, %v823
    %v825 = vrot.slane %v792, %v824
    %v837 = vunpack.c.l.s4 1983009808
    %v838 = vunpack.c.0.s8 %v837
    %v839 = vlaneseq
    %v840 = vshrl.u32 %v839, 7
    %v841 = vsub.s32 %v838, %v840
    %v842 = vrot.slane %v772, %v841
    %v844 = vunpack.c.l.s4 1983009808
    %v845 = vunpack.c.0.s8 %v844
    %v846 = vlaneseq
    %v847 = vshrl.u32 %v846, 7
    %v848 = vsub.s32 %v845, %v847
    %v849 = vrot.slane %v773, %v848
    %v850 = vunpack.c.l.b16 %v842
    %v851 = vunpack.c.l.b16 %v849
    %v852 = vrot.slane %v850, 2
    %v853 = vrot.slane %v851, 1
    %v854 = vsel %vm99, %v853, %v852
    %v855 = vpack.c.b16 %v854, %v854
    %v872 = vunpack.c.l.b16 %v775
    %v873 = vunpack.c.h.b16 %v775
    %v874 = vunpack.c.l.b16 %v776
    %v875 = vunpack.c.h.b16 %v776
    %v876 = vunpack.c.l.b16 %v777
    %v877 = vunpack.c.h.b16 %v777
    %v878 = vunpack.c.l.b16 %v778
    %v879 = vunpack.c.h.b16 %v778
    %v880 = vunpack.c.l.b16 %v779
    %v881 = vunpack.c.h.b16 %v779
    %v882 = vunpack.c.l.b16 %v780
    %v883 = vunpack.c.h.b16 %v780
    %v884 = vunpack.c.l.b16 %v781
    %v885 = vunpack.c.h.b16 %v781
    %v886 = vunpack.c.l.b16 %v782
    %v887 = vunpack.c.h.b16 %v782
    %v888 = vunpack.c.l.b16 %v783
    %v889 = vunpack.c.h.b16 %v783
    %v890 = vunpack.c.l.b16 %v784
    %v891 = vunpack.c.h.b16 %v784
    %v892 = vunpack.c.l.b16 %v785
    %v893 = vunpack.c.h.b16 %v785
    %v894 = vunpack.c.l.b16 %v786
    %v895 = vunpack.c.h.b16 %v786
    %v896 = vunpack.c.l.b16 %v787
    %v897 = vunpack.c.h.b16 %v787
    %v898 = vunpack.c.l.b16 %v788
    %v899 = vunpack.c.h.b16 %v788
    %v900 = vunpack.c.l.b16 %v789
    %v901 = vunpack.c.h.b16 %v789
    %v902 = vunpack.c.l.b16 %v790
    %v903 = vunpack.c.h.b16 %v790
    %v904 = vpack.c.b16 %v880, %v872
    %v905 = vpack.c.b16 %v881, %v873
    %v906 = vpack.c.b16 %v882, %v874
    %v907 = vpack.c.b16 %v883, %v875
    %v908 = vpack.c.b16 %v884, %v876
    %v909 = vpack.c.b16 %v885, %v877
    %v910 = vpack.c.b16 %v886, %v878
    %v911 = vpack.c.b16 %v887, %v879
    %v912 = vpack.c.b16 %v896, %v888
    %v913 = vpack.c.b16 %v897, %v889
    %v914 = vpack.c.b16 %v898, %v890
    %v915 = vpack.c.b16 %v899, %v891
    %v916 = vpack.c.b16 %v900, %v892
    %v917 = vpack.c.b16 %v901, %v893
    %v918 = vpack.c.b16 %v902, %v894
    %v919 = vpack.c.b16 %v903, %v895
    %v937 = vsel %vm182, %v855, 0
    %939 = vmatprep.subr.bf16.mxu0 %v905
    %940 = vmatpush1.bf16.msra.mxu0 %v904
    %941 = vmatprep.subr.bf16.mxu0 %v913
    %942 = vmatpush1.bf16.msra.mxu0 %v912
    %943 = vmatprep.subr.bf16.mxu0 0
    %944 = vmatpush1.bf16.msra.mxu0 0
    %945 = vmatprep.subr.bf16.mxu0 0
    %946 = vmatpush1.bf16.msra.mxu0 0
    %947 = vmatprep.subr.bf16.mxu0 0
    %948 = vmatpush1.bf16.msra.mxu0 0
    %949 = vmatprep.subr.bf16.mxu0 0
    %950 = vmatpush1.bf16.msra.mxu0 0
    %951 = vmatprep.subr.bf16.mxu0 0
    %952 = vmatpush1.bf16.msra.mxu0 0
    %953 = vmatprep.subr.bf16.mxu0 0
    %954 = vmatpush1.bf16.msra.mxu0 0
    %955 = vmatprep.subr.bf16.mxu0 0
    %956 = vmatpush1.bf16.msra.mxu0 0
    %957 = vmatprep.subr.bf16.mxu0 0
    %958 = vmatpush1.bf16.msra.mxu0 0
    %959 = vmatprep.subr.bf16.mxu0 0
    %960 = vmatpush1.bf16.msra.mxu0 0
    %961 = vmatprep.subr.bf16.mxu0 0
    %962 = vmatpush1.bf16.msra.mxu0 0
    %963 = vmatprep.subr.bf16.mxu0 0
    %964 = vmatpush1.bf16.msra.mxu0 0
    %965 = vmatprep.subr.bf16.mxu0 0
    %966 = vmatpush1.bf16.msra.mxu0 0
    %967 = vmatprep.subr.bf16.mxu0 0
    %968 = vmatpush1.bf16.msra.mxu0 0
    %969 = vmatprep.subr.bf16.mxu0 0
    %970 = vmatpush1.bf16.msra.mxu0 0
    %971 = vmatprep.mubr.bf16.mxu0 0
    %972 = vmatmul.mubr.bf16.gmra.mrb[0].mxu0 %v937
    %v973 = vpop.f32.mrb[0].mxu0
    %v974 = vadd.f32 %v797, %v973
    %v975 = vpop.f32.mrb[0].mxu0
    %v976 = vadd.f32 %v801, %v975
    %v977 = vpop.f32.mrb[0].mxu0
    %v978 = vpop.f32.mrb[0].mxu0
    %979 = vdwg.mxu0
    %980 = vmatprep.subr.bf16.mxu0 %v907
    %981 = vmatpush1.bf16.msra.mxu0 %v906
    %982 = vmatprep.subr.bf16.mxu0 %v915
    %983 = vmatpush1.bf16.msra.mxu0 %v914
    %984 = vmatprep.subr.bf16.mxu0 0
    %985 = vmatpush1.bf16.msra.mxu0 0
    %986 = vmatprep.subr.bf16.mxu0 0
    %987 = vmatpush1.bf16.msra.mxu0 0
    %988 = vmatprep.subr.bf16.mxu0 0
    %989 = vmatpush1.bf16.msra.mxu0 0
    %990 = vmatprep.subr.bf16.mxu0 0
    %991 = vmatpush1.bf16.msra.mxu0 0
    %992 = vmatprep.subr.bf16.mxu0 0
    %993 = vmatpush1.bf16.msra.mxu0 0
    %994 = vmatprep.subr.bf16.mxu0 0
    %995 = vmatpush1.bf16.msra.mxu0 0
    %996 = vmatprep.subr.bf16.mxu0 0
    %997 = vmatpush1.bf16.msra.mxu0 0
    %998 = vmatprep.subr.bf16.mxu0 0
    %999 = vmatpush1.bf16.msra.mxu0 0
    %1000 = vmatprep.subr.bf16.mxu0 0
    %1001 = vmatpush1.bf16.msra.mxu0 0
    %1002 = vmatprep.subr.bf16.mxu0 0
    %1003 = vmatpush1.bf16.msra.mxu0 0
    %1004 = vmatprep.subr.bf16.mxu0 0
    %1005 = vmatpush1.bf16.msra.mxu0 0
    %1006 = vmatprep.subr.bf16.mxu0 0
    %1007 = vmatpush1.bf16.msra.mxu0 0
    %1008 = vmatprep.subr.bf16.mxu0 0
    %1009 = vmatpush1.bf16.msra.mxu0 0
    %1010 = vmatprep.subr.bf16.mxu0 0
    %1011 = vmatpush1.bf16.msra.mxu0 0
    %1012 = vmatprep.mubr.bf16.mxu0 0
    %1013 = vmatmul.mubr.bf16.gmra.mrb[0].mxu0 %v937
    %v1014 = vpop.f32.mrb[0].mxu0
    %v1015 = vadd.f32 %v805, %v1014
    %v1016 = vpop.f32.mrb[0].mxu0
    %v1017 = vadd.f32 %v809, %v1016
    %v1018 = vpop.f32.mrb[0].mxu0
    %v1019 = vpop.f32.mrb[0].mxu0
    %1020 = vdwg.mxu0
    %1021 = vmatprep.subr.bf16.mxu0 %v909
    %1022 = vmatpush1.bf16.msra.mxu0 %v908
    %1023 = vmatprep.subr.bf16.mxu0 %v917
    %1024 = vmatpush1.bf16.msra.mxu0 %v916
    %1025 = vmatprep.subr.bf16.mxu0 0
    %1026 = vmatpush1.bf16.msra.mxu0 0
    %1027 = vmatprep.subr.bf16.mxu0 0
    %1028 = vmatpush1.bf16.msra.mxu0 0
    %1029 = vmatprep.subr.bf16.mxu0 0
    %1030 = vmatpush1.bf16.msra.mxu0 0
    %1031 = vmatprep.subr.bf16.mxu0 0
    %1032 = vmatpush1.bf16.msra.mxu0 0
    %1033 = vmatprep.subr.bf16.mxu0 0
    %1034 = vmatpush1.bf16.msra.mxu0 0
    %1035 = vmatprep.subr.bf16.mxu0 0
    %1036 = vmatpush1.bf16.msra.mxu0 0
    %1037 = vmatprep.subr.bf16.mxu0 0
    %1038 = vmatpush1.bf16.msra.mxu0 0
    %1039 = vmatprep.subr.bf16.mxu0 0
    %1040 = vmatpush1.bf16.msra.mxu0 0
    %1041 = vmatprep.subr.bf16.mxu0 0
    %1042 = vmatpush1.bf16.msra.mxu0 0
    %1043 = vmatprep.subr.bf16.mxu0 0
    %1044 = vmatpush1.bf16.msra.mxu0 0
    %1045 = vmatprep.subr.bf16.mxu0 0
    %1046 = vmatpush1.bf16.msra.mxu0 0
    %1047 = vmatprep.subr.bf16.mxu0 0
    %1048 = vmatpush1.bf16.msra.mxu0 0
    %1049 = vmatprep.subr.bf16.mxu0 0
    %1050 = vmatpush1.bf16.msra.mxu0 0
    %1051 = vmatprep.subr.bf16.mxu0 0
    %1052 = vmatpush1.bf16.msra.mxu0 0
    %1053 = vmatprep.mubr.bf16.mxu0 0
    %1054 = vmatmul.mubr.bf16.gmra.mrb[0].mxu0 %v937
    %v1055 = vpop.f32.mrb[0].mxu0
    %v1056 = vadd.f32 %v813, %v1055
    %v1057 = vpop.f32.mrb[0].mxu0
    %v1058 = vadd.f32 %v817, %v1057
    %v1059 = vpop.f32.mrb[0].mxu0
    %v1060 = vpop.f32.mrb[0].mxu0
    %1061 = vdwg.mxu0
    %1062 = vmatprep.subr.bf16.mxu0 %v911
    %1063 = vmatpush1.bf16.msra.mxu0 %v910
    %1064 = vmatprep.subr.bf16.mxu0 %v919
    %1065 = vmatpush1.bf16.msra.mxu0 %v918
    %1066 = vmatprep.subr.bf16.mxu0 0
    %1067 = vmatpush1.bf16.msra.mxu0 0
    %1068 = vmatprep.subr.bf16.mxu0 0
    %1069 = vmatpush1.bf16.msra.mxu0 0
    %1070 = vmatprep.subr.bf16.mxu0 0
    %1071 = vmatpush1.bf16.msra.mxu0 0
    %1072 = vmatprep.subr.bf16.mxu0 0
    %1073 = vmatpush1.bf16.msra.mxu0 0
    %1074 = vmatprep.subr.bf16.mxu0 0
    %1075 = vmatpush1.bf16.msra.mxu0 0
    %1076 = vmatprep.subr.bf16.mxu0 0
    %1077 = vmatpush1.bf16.msra.mxu0 0
    %1078 = vmatprep.subr.bf16.mxu0 0
    %1079 = vmatpush1.bf16.msra.mxu0 0
    %1080 = vmatprep.subr.bf16.mxu0 0
    %1081 = vmatpush1.bf16.msra.mxu0 0
    %1082 = vmatprep.subr.bf16.mxu0 0
    %1083 = vmatpush1.bf16.msra.mxu0 0
    %1084 = vmatprep.subr.bf16.mxu0 0
    %1085 = vmatpush1.bf16.msra.mxu0 0
    %1086 = vmatprep.subr.bf16.mxu0 0
    %1087 = vmatpush1.bf16.msra.mxu0 0
    %1088 = vmatprep.subr.bf16.mxu0 0
    %1089 = vmatpush1.bf16.msra.mxu0 0
    %1090 = vmatprep.subr.bf16.mxu0 0
    %1091 = vmatpush1.bf16.msra.mxu0 0
    %1092 = vmatprep.subr.bf16.mxu0 0
    %1093 = vmatpush1.bf16.msra.mxu0 0
    %1094 = vmatprep.mubr.bf16.mxu0 0
    %1095 = vmatmul.mubr.bf16.gmra.mrb[0].mxu0 %v937
    %v1096 = vpop.f32.mrb[0].mxu0
    %v1097 = vadd.f32 %v821, %v1096
    %v1098 = vpop.f32.mrb[0].mxu0
    %v1099 = vadd.f32 %v825, %v1098
    %v1100 = vpop.f32.mrb[0].mxu0
    %v1101 = vpop.f32.mrb[0].mxu0
    %1102 = vdwg.mxu0
    %v1111 = vcombine.low %v974, %v976
    %v1112 = vcombine.low %v1015, %v1017
    %v1114 = vunpack.c.l.s4 1983009808
    %v1115 = vunpack.c.0.s8 %v1114
    %v1116 = vlaneseq
    %v1117 = vshrl.u32 %v1116, 7
    %v1118 = vsub.s32 %v1115, %v1117
    %v1119 = vrot.slane %v1111, %v1118
    %v1121 = vunpack.c.l.s4 1983009808
    %v1122 = vunpack.c.0.s8 %v1121
    %v1123 = vlaneseq
    %v1124 = vshrl.u32 %v1123, 7
    %v1125 = vsub.s32 %v1122, %v1124
    %v1126 = vrot.slane %v1112, %v1125
    %v1127 = vcombine.low %v1119, %v1126
    %v1128 = vcombine.low %v1056, %v1058
    %v1129 = vcombine.low %v1097, %v1099
    %v1131 = vunpack.c.l.s4 1983009808
    %v1132 = vunpack.c.0.s8 %v1131
    %v1133 = vlaneseq
    %v1134 = vshrl.u32 %v1133, 7
    %v1135 = vsub.s32 %v1132, %v1134
    %v1136 = vrot.slane %v1128, %v1135
    %v1138 = vunpack.c.l.s4 1983009808
    %v1139 = vunpack.c.0.s8 %v1138
    %v1140 = vlaneseq
    %v1141 = vshrl.u32 %v1140, 7
    %v1142 = vsub.s32 %v1139, %v1141
    %v1143 = vrot.slane %v1129, %v1142
    %v1144 = vcombine.low %v1136, %v1143
    %1147 = vst [vmem:[#allocation6] sm:$0xff] %v1127
    %1148 = vst [vmem:[#allocation6 + $0x8] sm:$0xff] %v1144
    // Predicated region
    $region14: #{classifier_forward.1} parent=1 // pred_check
      _
    $region15: #{classifier_forward.1} parent=1 // pred_check_branch
      %1150 = sbr.rel (0) target = $region17
    $region16: #{classifier_forward.1} parent=1 // pred_region
      %s1152 = ssub.s32 256, 256
      %1153 = vsyncadd [#allocation3], %s1152
      %s1155 = sshll.u32 [#allocation2], 4
      %s1156 = int_to_ptr.vmem [resolvable:$true] %s1155
      %1158 = dma.vmem_to_hbm [thread:$0]  %s1156, 256, %s3, [#allocation3]
    $region17: #{classifier_forward.1} parent=1 // pred_fallthru
      _
    // Predicated region
    $region18: #{classifier_forward.1} parent=1 // pred_check
      _
    $region19: #{classifier_forward.1} parent=1 // pred_check_branch
      %1160 = sbr.rel (0) target = $region21
    $region20: #{classifier_forward.1} parent=1 // pred_region
      %s1162 = ssub.s32 256, 256
      %1163 = vsyncadd [#allocation5], %s1162
      %s1165 = sshll.u32 [#allocation4], 4
      %s1166 = int_to_ptr.vmem [resolvable:$true] %s1165
      %1168 = dma.vmem_to_hbm [thread:$0]  %s1166, 256, %s4, [#allocation5]
    $region21: #{classifier_forward.1} parent=1 // pred_fallthru
      _
    // Predicated region
    $region22: #{classifier_forward.1} parent=1 // pred_check
      _
    $region23: #{classifier_forward.1} parent=1 // pred_check_branch
      %1170 = sbr.rel (0) target = $region25
    $region24: #{classifier_forward.1} parent=1 // pred_region
      %s1172 = ssub.s32 256, 256
      %1173 = vsyncadd [#allocation5], %s1172
      %s1175 = sshll.u32 [#allocation6], 4
      %s1176 = int_to_ptr.vmem [resolvable:$true] %s1175
      %1178 = dma.vmem_to_hbm [thread:$0]  %s1176, 256, %s5, [#allocation5]
    $region25: #{classifier_forward.1} parent=1 // pred_fallthru
      _
    // Predicated region
    $region26: #{classifier_forward.1} parent=1 // pred_check
      _
    $region27: #{classifier_forward.1} parent=1 // pred_check_branch
      %1180 = sbr.rel (0) target = $region29
    $region28: #{classifier_forward.1} parent=1 // pred_region
      %1181 = dma.done [#allocation3], 256
    $region29: #{classifier_forward.1} parent=1 // pred_fallthru
      _
    // Predicated region
    $region30: #{classifier_forward.1} parent=1 // pred_check
      _
    $region31: #{classifier_forward.1} parent=1 // pred_check_branch
      %1183 = sbr.rel (0) target = $region33
    $region32: #{classifier_forward.1} parent=1 // pred_region
      %1184 = dma.done [#allocation5], 256
    $region33: #{classifier_forward.1} parent=1 // pred_fallthru
      _
    // Predicated region
    $region34: #{classifier_forward.1} parent=1 // pred_check
      _
    $region35: #{classifier_forward.1} parent=1 // pred_check_branch
      %1186 = sbr.rel (0) target = $region37
    $region36: #{classifier_forward.1} parent=1 // pred_region
      %1187 = dma.done [#allocation5], 256
    $region37: #{classifier_forward.1} parent=1 // pred_fallthru
      _
    %1188 = vsyncpa [#allocation3], 1
    %1189 = vsyncpa [#allocation5], 1

</llo_original>
